<compile_context>
chip_gen: v5e
topology: v5e:2x2
jax: 0.10.0
libtpu: 0.0.40
codegen_flags: <defaults>
</compile_context>

<pallas_src>
import functools

import jax
import jax.numpy as jnp
from jax.experimental import pallas as pl
from jax.experimental.pallas import tpu as pltpu

T_MIN = 1.0
T_MAX = 2.0


def _round_up(x, m):
    return (x + m - 1) // m * m


def _padded_bytes(rows, cols, dtype):
    """VMEM bytes of a (rows, cols) buffer after (sublane, lane) layout padding."""
    it = jnp.dtype(dtype).itemsize
    sub = 8 * max(1, 4 // it)            # 8 rows f32, 16 rows bf16, 32 rows int8
    return _round_up(max(rows, 1), sub) * _round_up(max(cols, 1), 128) * it


def _spiking_conv_kernel(x_ref, w_ref, d_ref, o_ref, patches_ref, *,
                         kh, kw, wp, t_min, t_max):
    """One (batch, row-tile) grid step.

    x_ref       : (Cin, wlen)   bf16  lane-dense flat window of the padded
                                      difference image (rows of this tile +
                                      halo, flattened as rows*Wp, + slack)
    w_ref       : (F, K)        bf16  K = kh*kw*Cin, k = (dy*kw + dx)*Cin + c
    d_ref       : (F, 1)        f32   per-output-channel delay D_i
    o_ref       : (F, mtv_pad)  f32   clamped output spike times (lane-dense)
    patches_ref : (K, mtv_pad)  bf16  VMEM scratch patch tile
    """
    cin = x_ref.shape[0]
    mtp = o_ref.shape[-1]

    # Fused im2col: every tap is a *static* lane-offset slice of the flat
    # window, written straight into the scratch patch tile (no concatenate
    # double-copy, no cross-lane repack, no dynamic slicing).
    for dy in range(kh):
        for dx in range(kw):
            t = dy * kw + dx
            off = dy * wp + dx
            patches_ref[t * cin:(t + 1) * cin, :] = x_ref[:, off:off + mtp]

    # MXU: (F, K) @ (K, mtv_pad), f32 accumulation.
    acc = jnp.dot(w_ref[...], patches_ref[...],
                  preferred_element_type=jnp.float32)

    # TTFS spike time with hard-tanh style clamp to [t_min, t_max] (f32).
    ti = acc + d_ref[...]
    ti = jnp.minimum(jnp.maximum(ti, t_min), t_max)
    o_ref[...] = ti.astype(o_ref.dtype)


def _pick_row_tile(n, h, wp, w, target_lanes, min_steps=4):
    """Row tile TH dividing H: prefer enough grid steps for both cores, then
    lane efficiency (valid columns / padded lanes), 256-lane multiples, TH."""
    best, best_key = 1, None
    for th in range(1, h + 1):
        if h % th:
            continue
        mtv_pad = _round_up(th * wp, 128)
        if mtv_pad > target_lanes and th > 1:
            continue
        eff = (th * w) / mtv_pad
        steps = n * (h // th)
        key = (steps >= min_steps, eff, mtv_pad % 256 == 0, th)
        if best_key is None or key > best_key:
            best_key, best = key, th
    return best


def spiking_conv2d_all(tj_nchw, kernels, biases,
                       t_min=T_MIN, t_max=T_MAX,
                       compute_dtype=jnp.bfloat16,
                       out_dtype=jnp.float32):
    """Forward pass of SpikingConv2D_all.

    tj_nchw : [N, 2*Cin, H, W]  input spike times (NCHW, like PyTorch)
    kernels : [F, Cin, kh, kw]  base conv kernels (module doubles with -kernels)
    biases  : [F]               per-output-channel delay D_i
    """
    f_out, cin, kh, kw = kernels.shape
    # TODO(synk): only odd 'same' kernels / stride=1 supported.
    assert kh % 2 == 1 and kw % 2 == 1, "only odd kernel sizes supported"

    n, c, h, w = tj_nchw.shape
    assert c == 2 * cin, f"input channels {c} must equal 2*Cin = {2 * cin}"
    ph, pw = kh // 2, kw // 2
    hp, wp = h + 2 * ph, w + 2 * pw

    # --- algebraic fold of the +/- kernel doubling (f32 subtract, then cast).
    x32 = tj_nchw.astype(jnp.float32)
    x_diff = x32[:, :cin] - x32[:, cin:]                    # (N, Cin, H, W)
    # TODO(synk): zero border padding matches F.conv2d numerically; strict
    # TTFS "no spike" border semantics might want t_max padding instead.
    x_pad = jnp.pad(x_diff, ((0, 0), (0, 0), (ph, ph), (pw, pw)))

    k = kh * kw * cin
    # w_mat[f, (dy*kw + dx)*Cin + c] = kernels[f, c, dy, dx]
    w_mat = jnp.transpose(kernels, (0, 2, 3, 1)).reshape(f_out, k)
    w_mat = w_mat.astype(compute_dtype)
    d_col = biases.reshape(f_out, 1).astype(jnp.float32)

    # --- generation-aware tiling / VMEM budget.
    try:
        cap = int(getattr(pltpu.get_tpu_info(), "vmem_capacity_bytes",
                          64 * 2**20))
    except Exception:                                       # pragma: no cover
        cap = 64 * 2**20
    target_lanes = 1024 if cap <= 64 * 2**20 else 2048

    th = _pick_row_tile(n, h, wp, w, target_lanes)
    n_row = h // th
    mtv = th * wp                                           # valid tile lanes
    mtv_pad = _round_up(mtv, 128)                           # stored tile lanes
    max_off = (kh - 1) * wp + (kw - 1)
    wlen = max_off + mtv_pad                                # window flat length

    # --- lane-dense flat row-tile windows (halo rows duplicated in HBM).
    x_flat = x_pad.reshape(n, cin, hp * wp)
    need = (n_row - 1) * mtv + wlen
    x_flat = jnp.pad(x_flat, ((0, 0), (0, 0), (0, need - hp * wp)))
    x_win = jnp.stack([x_flat[:, :, i * mtv:i * mtv + wlen]
                       for i in range(n_row)], axis=1)      # (N, n_row, Cin, wlen)
    x_win = x_win.astype(compute_dtype)

    # --- layout-padded VMEM estimate -> vmem_limit (double-buffered operands).
    est = (2 * _padded_bytes(cin, wlen, compute_dtype)        # image window
           + 2 * _padded_bytes(f_out, k, compute_dtype)       # weights
           + 2 * _padded_bytes(f_out, 1, jnp.float32)         # delays
           + 2 * _padded_bytes(f_out, mtv_pad, out_dtype)     # output tile
           + _padded_bytes(k, mtv_pad, compute_dtype)         # patch scratch
           + 2 * _padded_bytes(f_out, mtv_pad, jnp.float32)   # acc / temps
           + 2 * _padded_bytes(cin, mtv_pad, compute_dtype))  # slab temps
    ceiling = (cap * 3) // 4
    vmem_limit = int(max(16 * 2**20, min(ceiling, 4 * est)))

    bs = jnp.dtype(compute_dtype).itemsize
    cost = pl.CostEstimate(
        flops=2 * n * h * w * k * f_out,
        transcendentals=0,
        bytes_accessed=(n * n_row * cin * wlen * bs
                        + f_out * k * bs + f_out * 4
                        + n * f_out * n_row * mtv_pad
                        * jnp.dtype(out_dtype).itemsize))

    kern = functools.partial(_spiking_conv_kernel, kh=kh, kw=kw, wp=wp,
                             t_min=float(t_min), t_max=float(t_max))

    out_flat = pl.pallas_call(
        kern,
        out_shape=jax.ShapeDtypeStruct((n, f_out, n_row * mtv_pad), out_dtype),
        grid_spec=pltpu.PrefetchScalarGridSpec(
            num_scalar_prefetch=0,
            grid=(n, n_row),
            in_specs=[
                # flat halo window of this (batch, row-tile): fully lane-dense
                pl.BlockSpec((None, None, cin, wlen), lambda b, i: (b, i, 0, 0)),
                # weights and delays: same block for the whole grid
                pl.BlockSpec((f_out, k), lambda b, i: (0, 0)),
                pl.BlockSpec((f_out, 1), lambda b, i: (0, 0)),
            ],
            out_specs=pl.BlockSpec((None, f_out, mtv_pad),
                                   lambda b, i: (b, 0, i)),
            scratch_shapes=[pltpu.VMEM((k, mtv_pad), compute_dtype)],
        ),
        compiler_params=pltpu.CompilerParams(
            dimension_semantics=("parallel", "parallel"),
            vmem_limit_bytes=vmem_limit),
        cost_estimate=cost,
    )(x_win, w_mat, d_col)

    # (N, F, n_row*mtv_pad) -> (N, F, H, W): slice off pad / wp-junk columns.
    out = out_flat.reshape(n, f_out, n_row, mtv_pad)[..., :mtv]
    out = out.reshape(n, f_out, h, wp)[..., :w]
    return out


def _reference(tj, kernels, biases, t_min=T_MIN, t_max=T_MAX):
    """Plain-JAX reference (f32) of the same forward pass."""
    w_all = jnp.concatenate([kernels, -kernels], axis=1)
    out = jax.lax.conv_general_dilated(
        tj, w_all, window_strides=(1, 1), padding="SAME",
        dimension_numbers=("NCHW", "OIHW", "NCHW"))
    out = out + biases.reshape(1, -1, 1, 1)
    return jnp.clip(out, t_min, t_max)


if __name__ == "__main__":
    key = jax.random.PRNGKey(0)
    k1, k2, k3 = jax.random.split(key, 3)

    N, Cin, H, W = 2, 2, 16, 16          # input has 2*Cin = 4 channels
    F_out, kh, kw = 8, 3, 3

    kernels = 0.1 * jax.random.normal(k1, (F_out, Cin, kh, kw), jnp.float32)
    biases = 0.1 * jax.random.normal(k2, (F_out,), jnp.float32)
    tj = jax.random.uniform(k3, (N, 2 * Cin, H, W), jnp.float32,
                            minval=0.0, maxval=T_MIN)

    fwd = jax.jit(spiking_conv2d_all)
    out = fwd(tj, kernels, biases)
    jax.block_until_ready(out)

    assert out.shape == (N, F_out, H, W)
    assert bool(jnp.all(out >= T_MIN)) and bool(jnp.all(out <= T_MAX))

    ref = _reference(tj, kernels, biases)
    max_err = float(jnp.max(jnp.abs(out - ref)))
    assert max_err < 5e-2, f"mismatch vs reference: max abs err = {max_err}"
    print("KERNEL_OK")
</pallas_src>

<mosaic_0001>
module attributes {stable_mosaic.version = 11 : i64} {
  func.func @_spiking_conv_kernel(%arg0: i32, %arg1: i32, %arg2: memref<1x1x2x294xbf16, #tpu.memory_space<vmem>>, %arg3: memref<8x18xbf16, #tpu.memory_space<vmem>>, %arg4: memref<8x1xf32, #tpu.memory_space<vmem>>, %arg5: memref<1x8x256xf32, #tpu.memory_space<vmem>>, %arg6: memref<18x256xbf16, #tpu.memory_space<vmem>>) attributes {dimension_semantics = [#tpu.dimension_semantics<parallel>, #tpu.dimension_semantics<parallel>], iteration_bounds = array<i64: 2, 2>, scalar_prefetch = 0 : i64, scratch_operands = 1 : i64, tpu.core_type = #tpu.core_type<tc>, window_params = [{transform_indices = @transform_0, window_bounds = array<i64: 1, 1, 2, 294>}, {pipeline_mode = #tpu.pipeline_mode<synchronous>, transform_indices = @transform_1, window_bounds = array<i64: 8, 18>}, {pipeline_mode = #tpu.pipeline_mode<synchronous>, transform_indices = @transform_2, window_bounds = array<i64: 8, 1>}, {transform_indices = @transform_3, window_bounds = array<i64: 1, 8, 256>}]} {
    %c0 = arith.constant 0 : index
    %c0_0 = arith.constant 0 : index
    %c0_1 = arith.constant 0 : index
    %c0_2 = arith.constant 0 : index
    %0 = vector.load %arg2[%c0, %c0_0, %c0_1, %c0_2] : memref<1x1x2x294xbf16, #tpu.memory_space<vmem>>, vector<1x1x2x256xbf16>
    %1 = vector.shape_cast %0 : vector<1x1x2x256xbf16> to vector<2x256xbf16>
    %c0_3 = arith.constant 0 : index
    %c0_4 = arith.constant 0 : index
    %2 = vector.load %arg6[%c0_3, %c0_4] : memref<18x256xbf16, #tpu.memory_space<vmem>>, vector<2x256xbf16>
    tpu.vector_store %arg6[%c0_3, %c0_4], %1 {strides = array<i32>} : memref<18x256xbf16, #tpu.memory_space<vmem>>, vector<2x256xbf16>,
    %c0_5 = arith.constant 0 : index
    %c0_6 = arith.constant 0 : index
    %c0_7 = arith.constant 0 : index
    %c1 = arith.constant 1 : index
    %3 = vector.load %arg2[%c0_5, %c0_6, %c0_7, %c1] : memref<1x1x2x294xbf16, #tpu.memory_space<vmem>>, vector<1x1x2x256xbf16>
    %4 = vector.shape_cast %3 : vector<1x1x2x256xbf16> to vector<2x256xbf16>
    %c2 = arith.constant 2 : index
    %c0_8 = arith.constant 0 : index
    %5 = vector.load %arg6[%c2, %c0_8] : memref<18x256xbf16, #tpu.memory_space<vmem>>, vector<2x256xbf16>
    tpu.vector_store %arg6[%c2, %c0_8], %4 {strides = array<i32>} : memref<18x256xbf16, #tpu.memory_space<vmem>>, vector<2x256xbf16>,
    %c0_9 = arith.constant 0 : index
    %c0_10 = arith.constant 0 : index
    %c0_11 = arith.constant 0 : index
    %c2_12 = arith.constant 2 : index
    %6 = vector.load %arg2[%c0_9, %c0_10, %c0_11, %c2_12] : memref<1x1x2x294xbf16, #tpu.memory_space<vmem>>, vector<1x1x2x256xbf16>
    %7 = vector.shape_cast %6 : vector<1x1x2x256xbf16> to vector<2x256xbf16>
    %c4 = arith.constant 4 : index
    %c0_13 = arith.constant 0 : index
    %8 = vector.load %arg6[%c4, %c0_13] : memref<18x256xbf16, #tpu.memory_space<vmem>>, vector<2x256xbf16>
    tpu.vector_store %arg6[%c4, %c0_13], %7 {strides = array<i32>} : memref<18x256xbf16, #tpu.memory_space<vmem>>, vector<2x256xbf16>,
    %c0_14 = arith.constant 0 : index
    %c0_15 = arith.constant 0 : index
    %c0_16 = arith.constant 0 : index
    %c18 = arith.constant 18 : index
    %9 = vector.load %arg2[%c0_14, %c0_15, %c0_16, %c18] : memref<1x1x2x294xbf16, #tpu.memory_space<vmem>>, vector<1x1x2x256xbf16>
    %10 = vector.shape_cast %9 : vector<1x1x2x256xbf16> to vector<2x256xbf16>
    %c6 = arith.constant 6 : index
    %c0_17 = arith.constant 0 : index
    %11 = vector.load %arg6[%c6, %c0_17] : memref<18x256xbf16, #tpu.memory_space<vmem>>, vector<2x256xbf16>
    tpu.vector_store %arg6[%c6, %c0_17], %10 {strides = array<i32>} : memref<18x256xbf16, #tpu.memory_space<vmem>>, vector<2x256xbf16>,
    %c0_18 = arith.constant 0 : index
    %c0_19 = arith.constant 0 : index
    %c0_20 = arith.constant 0 : index
    %c19 = arith.constant 19 : index
    %12 = vector.load %arg2[%c0_18, %c0_19, %c0_20, %c19] : memref<1x1x2x294xbf16, #tpu.memory_space<vmem>>, vector<1x1x2x256xbf16>
    %13 = vector.shape_cast %12 : vector<1x1x2x256xbf16> to vector<2x256xbf16>
    %c8 = arith.constant 8 : index
    %c0_21 = arith.constant 0 : index
    %14 = vector.load %arg6[%c8, %c0_21] : memref<18x256xbf16, #tpu.memory_space<vmem>>, vector<2x256xbf16>
    tpu.vector_store %arg6[%c8, %c0_21], %13 {strides = array<i32>} : memref<18x256xbf16, #tpu.memory_space<vmem>>, vector<2x256xbf16>,
    %c0_22 = arith.constant 0 : index
    %c0_23 = arith.constant 0 : index
    %c0_24 = arith.constant 0 : index
    %c20 = arith.constant 20 : index
    %15 = vector.load %arg2[%c0_22, %c0_23, %c0_24, %c20] : memref<1x1x2x294xbf16, #tpu.memory_space<vmem>>, vector<1x1x2x256xbf16>
    %16 = vector.shape_cast %15 : vector<1x1x2x256xbf16> to vector<2x256xbf16>
    %c10 = arith.constant 10 : index
    %c0_25 = arith.constant 0 : index
    %17 = vector.load %arg6[%c10, %c0_25] : memref<18x256xbf16, #tpu.memory_space<vmem>>, vector<2x256xbf16>
    tpu.vector_store %arg6[%c10, %c0_25], %16 {strides = array<i32>} : memref<18x256xbf16, #tpu.memory_space<vmem>>, vector<2x256xbf16>,
    %c0_26 = arith.constant 0 : index
    %c0_27 = arith.constant 0 : index
    %c0_28 = arith.constant 0 : index
    %c36 = arith.constant 36 : index
    %18 = vector.load %arg2[%c0_26, %c0_27, %c0_28, %c36] : memref<1x1x2x294xbf16, #tpu.memory_space<vmem>>, vector<1x1x2x256xbf16>
    %19 = vector.shape_cast %18 : vector<1x1x2x256xbf16> to vector<2x256xbf16>
    %c12 = arith.constant 12 : index
    %c0_29 = arith.constant 0 : index
    %20 = vector.load %arg6[%c12, %c0_29] : memref<18x256xbf16, #tpu.memory_space<vmem>>, vector<2x256xbf16>
    tpu.vector_store %arg6[%c12, %c0_29], %19 {strides = array<i32>} : memref<18x256xbf16, #tpu.memory_space<vmem>>, vector<2x256xbf16>,
    %c0_30 = arith.constant 0 : index
    %c0_31 = arith.constant 0 : index
    %c0_32 = arith.constant 0 : index
    %c37 = arith.constant 37 : index
    %21 = vector.load %arg2[%c0_30, %c0_31, %c0_32, %c37] : memref<1x1x2x294xbf16, #tpu.memory_space<vmem>>, vector<1x1x2x256xbf16>
    %22 = vector.shape_cast %21 : vector<1x1x2x256xbf16> to vector<2x256xbf16>
    %c14 = arith.constant 14 : index
    %c0_33 = arith.constant 0 : index
    %23 = vector.load %arg6[%c14, %c0_33] : memref<18x256xbf16, #tpu.memory_space<vmem>>, vector<2x256xbf16>
    tpu.vector_store %arg6[%c14, %c0_33], %22 {strides = array<i32>} : memref<18x256xbf16, #tpu.memory_space<vmem>>, vector<2x256xbf16>,
    %c0_34 = arith.constant 0 : index
    %c0_35 = arith.constant 0 : index
    %c0_36 = arith.constant 0 : index
    %c38 = arith.constant 38 : index
    %24 = vector.load %arg2[%c0_34, %c0_35, %c0_36, %c38] : memref<1x1x2x294xbf16, #tpu.memory_space<vmem>>, vector<1x1x2x256xbf16>
    %25 = vector.shape_cast %24 : vector<1x1x2x256xbf16> to vector<2x256xbf16>
    %c16 = arith.constant 16 : index
    %c0_37 = arith.constant 0 : index
    %26 = vector.load %arg6[%c16, %c0_37] : memref<18x256xbf16, #tpu.memory_space<vmem>>, vector<2x256xbf16>
    tpu.vector_store %arg6[%c16, %c0_37], %25 {strides = array<i32>} : memref<18x256xbf16, #tpu.memory_space<vmem>>, vector<2x256xbf16>,
    %c0_38 = arith.constant 0 : index
    %c0_39 = arith.constant 0 : index
    %27 = vector.load %arg3[%c0_38, %c0_39] : memref<8x18xbf16, #tpu.memory_space<vmem>>, vector<8x18xbf16>
    %c0_40 = arith.constant 0 : index
    %c0_41 = arith.constant 0 : index
    %28 = vector.load %arg6[%c0_40, %c0_41] : memref<18x256xbf16, #tpu.memory_space<vmem>>, vector<18x256xbf16>
    %cst = arith.constant dense<0.000000e+00> : vector<8x256xf32>
    %29 = tpu.matmul %27, %28, %cst {dimension_numbers = #tpu.dot_dimension_numbers<[1], [0], [0], [1], [0, 0, 1, 1], [], []>} : vector<8x18xbf16>, vector<18x256xbf16>, vector<8x256xf32> -> vector<8x256xf32>
    %c0_42 = arith.constant 0 : index
    %c0_43 = arith.constant 0 : index
    %30 = vector.load %arg4[%c0_42, %c0_43] : memref<8x1xf32, #tpu.memory_space<vmem>>, vector<8x1xf32>
    %31 = vector.broadcast %30 : vector<8x1xf32> to vector<8x256xf32>
    %32 = arith.addf %29, %31 : vector<8x256xf32>
    %cst_44 = arith.constant 1.000000e+00 : f32
    %33 = vector.broadcast %cst_44 : f32 to vector<8x256xf32>
    %34 = arith.maximumf %32, %33 : vector<8x256xf32>
    %cst_45 = arith.constant 2.000000e+00 : f32
    %35 = vector.broadcast %cst_45 : f32 to vector<8x256xf32>
    %36 = arith.minimumf %34, %35 : vector<8x256xf32>
    %c0_46 = arith.constant 0 : index
    %c0_47 = arith.constant 0 : index
    %c0_48 = arith.constant 0 : index
    %37 = vector.load %arg5[%c0_46, %c0_47, %c0_48] : memref<1x8x256xf32, #tpu.memory_space<vmem>>, vector<1x8x256xf32>
    %38 = vector.shape_cast %37 : vector<1x8x256xf32> to vector<8x256xf32>
    %39 = vector.shape_cast %36 : vector<8x256xf32> to vector<1x8x256xf32>
    tpu.vector_store %arg5[%c0_46, %c0_47, %c0_48], %39 {strides = array<i32>} : memref<1x8x256xf32, #tpu.memory_space<vmem>>, vector<1x8x256xf32>,
    return
  }
  func.func @transform_0(%arg0: i32, %arg1: i32) -> (i32, i32, i32, i32) {
    %c0_i32 = arith.constant 0 : i32
    %c0_i32_0 = arith.constant 0 : i32
    %c0_i32_1 = arith.constant 0 : i32
    return %arg0, %arg1, %c0_i32, %c0_i32_0 : i32, i32, i32, i32
  }
  func.func @transform_1(%arg0: i32, %arg1: i32) -> (i32, i32) {
    %c0_i32 = arith.constant 0 : i32
    %c0_i32_0 = arith.constant 0 : i32
    %c0_i32_1 = arith.constant 0 : i32
    return %c0_i32, %c0_i32_0 : i32, i32
  }
  func.func @transform_2(%arg0: i32, %arg1: i32) -> (i32, i32) {
    %c0_i32 = arith.constant 0 : i32
    %c0_i32_0 = arith.constant 0 : i32
    %c0_i32_1 = arith.constant 0 : i32
    return %c0_i32, %c0_i32_0 : i32, i32
  }
  func.func @transform_3(%arg0: i32, %arg1: i32) -> (i32, i32, i32) {
    %c0_i32 = arith.constant 0 : i32
    %c0_i32_0 = arith.constant 0 : i32
    return %arg0, %c0_i32, %arg1 : i32, i32, i32
  }
}

</mosaic_0001>

<llo_original>
// kernel: spiking_conv2d_all.1
$region0: #{spiking_conv2d_all.1}
  #allocation0 [shape = 'u32[]', space=smem, size = 0x4, offset = 0x4, fixed_abs, tag = 'smem constant byte address 0x4 - core index']
  #allocation1 [shape = 'u32[72,128]{1,0:T(1,128)}', space=vmem, size = 0x9000, scoped, tag = 'internal scratch']
  #allocation2 [shape = 'bf16[18,256]{1,0:T(8,128)(2,1)}', space=vmem, size = 0x3000, scoped, tag = 'scratch operand']
  %s0 = inlined_call_operand.vmem [shape: bf16[2,2,2,294], index: 0, kind: input, shape index: {}]
  %s1 = inlined_call_operand.vmem [shape: bf16[8,18], index: 1, kind: input, shape index: {}]
  %s2 = inlined_call_operand.vmem [shape: f32[8,1], index: 2, kind: input, shape index: {}]
  %s3 = inlined_call_operand.vmem [shape: f32[2,8,512], index: 3, kind: output, shape index: {}]
  %s4 = sld [smem:[#allocation0]]
  $region45: #{spiking_conv2d_all.1} parent=0
    _
  %s6 = ssub.s32 1, %s4
  %s7 = scalar_select 0, %s6, %s4
  loop: start=0, step=1, limit=6
  $region2: #{spiking_conv2d_all.1} parent=0 // loop_pre_header
    _
  $region3: #{spiking_conv2d_all.1} parent=0 // loop_header
    %s9 = sphi 0, %s13
    %p10 = scmp.ge.s32.totalorder %s9, 6
    %s16 = sphi 0, %s28
    %s17 = sphi 0, %s24
    %s18 = sphi 0, %s16
    %s19 = sphi 0, %s17
    %s20 = sphi 0, %s18
    %s21 = sphi 0, %s19
    %s33 = sphi 0, %s35
    %s36 = sphi 0, %s33
    %s37 = sphi 0, %s36
    %s53 = sphi 0, %s37
    %s57 = sphi 0, %s57
    %s59 = sphi 0, %s57
    %s60 = sphi 0, %s59
    %s74 = sphi 0, %s60
    %s78 = sphi 0, %s78
    %s80 = sphi 0, %s78
    %s81 = sphi 0, %s80
    %s95 = sphi 0, %s81
    %s103 = sphi 0, %s105
    %s106 = sphi 0, %s103
    %s107 = sphi 0, %s106
    %s123 = sphi 0, %s107
  $region4: #{spiking_conv2d_all.1} parent=0 // loop_header_branch
    %12 = sbr.rel (%p10) target = $region8
  $region5: #{spiking_conv2d_all.1} parent=0 // loop_body
    %s14 = ssub.s32 %s9, 1
    %s15 = ssub.s32 %s9, 2
    %s22 = sadd.s32 1, %s17
    %p23 = scmp.ge.s32.totalorder %s22, 2
    %s24 = scalar_select %p23, 0, %s22
    %s25 = sadd.s32 1, %s16
    %s26 = scalar_select %p23, %s25, %s16
    %p27 = scmp.ge.s32.totalorder %s26, 2
    %s28 = scalar_select %p27, 0, %s26
    %s29 = ssub.s32 %s16, %s28
    %s30 = ssub.s32 %s17, %s24
    %s31 = sor.u32 %s29, %s30
    %p32 = scmp.eq.s32.totalorder %s31, 0
    %s34 = sadd.s32 %s33, 1
    %s35 = scalar_select %p32, %s33, %s34
    %p38 = pneg %p32
    %p39 = scmp.eq.s32.totalorder %s9, 3
    %p40 = por %p38, %p39
    %p41 = scmp.ne.s32.totalorder %s33, %s36
    %p42 = scmp.eq.s32.totalorder %s9, 0
    %p43 = por %p41, %p42
    %p44 = scmp.ne.s32.totalorder %s33, %s36
    %p45 = scmp.eq.s32.totalorder %s14, 3
    %p46 = por %p44, %p45
    %p47 = scmp.ne.s32.totalorder %s36, %s37
    %p48 = scmp.eq.s32.totalorder %s14, 0
    %p49 = por %p47, %p48
    %p50 = scmp.ne.s32.totalorder %s36, %s37
    %p51 = scmp.eq.s32.totalorder %s15, 3
    %p52 = por %p50, %p51
    %p54 = scmp.ne.s32.totalorder %s37, %s53
    %p55 = scmp.eq.s32.totalorder %s15, 0
    %p56 = por %p54, %p55
    %s58 = sadd.s32 %s57, 1
    %p61 = scmp.eq.s32.totalorder %s9, 3
    %p62 = scmp.ne.s32.totalorder %s57, %s59
    %p63 = scmp.eq.s32.totalorder %s9, 0
    %p64 = por %p62, %p63
    %p65 = scmp.ne.s32.totalorder %s57, %s59
    %p66 = scmp.eq.s32.totalorder %s14, 3
    %p67 = por %p65, %p66
    %p68 = scmp.ne.s32.totalorder %s59, %s60
    %p69 = scmp.eq.s32.totalorder %s14, 0
    %p70 = por %p68, %p69
    %p71 = scmp.ne.s32.totalorder %s59, %s60
    %p72 = scmp.eq.s32.totalorder %s15, 3
    %p73 = por %p71, %p72
    %p75 = scmp.ne.s32.totalorder %s60, %s74
    %p76 = scmp.eq.s32.totalorder %s15, 0
    %p77 = por %p75, %p76
    %s79 = sadd.s32 %s78, 1
    %p82 = scmp.eq.s32.totalorder %s9, 3
    %p83 = scmp.ne.s32.totalorder %s78, %s80
    %p84 = scmp.eq.s32.totalorder %s9, 0
    %p85 = por %p83, %p84
    %p86 = scmp.ne.s32.totalorder %s78, %s80
    %p87 = scmp.eq.s32.totalorder %s14, 3
    %p88 = por %p86, %p87
    %p89 = scmp.ne.s32.totalorder %s80, %s81
    %p90 = scmp.eq.s32.totalorder %s14, 0
    %p91 = por %p89, %p90
    %p92 = scmp.ne.s32.totalorder %s80, %s81
    %p93 = scmp.eq.s32.totalorder %s15, 3
    %p94 = por %p92, %p93
    %p96 = scmp.ne.s32.totalorder %s81, %s95
    %p97 = scmp.eq.s32.totalorder %s15, 0
    %p98 = por %p96, %p97
    %s99 = ssub.s32 %s16, %s28
    %s100 = ssub.s32 %s17, %s24
    %s101 = sor.u32 %s99, %s100
    %p102 = scmp.eq.s32.totalorder %s101, 0
    %s104 = sadd.s32 %s103, 1
    %s105 = scalar_select %p102, %s103, %s104
    %p108 = pneg %p102
    %p109 = scmp.eq.s32.totalorder %s9, 3
    %p110 = por %p108, %p109
    %p111 = scmp.ne.s32.totalorder %s103, %s106
    %p112 = scmp.eq.s32.totalorder %s9, 0
    %p113 = por %p111, %p112
    %p114 = scmp.ne.s32.totalorder %s103, %s106
    %p115 = scmp.eq.s32.totalorder %s14, 3
    %p116 = por %p114, %p115
    %p117 = scmp.ne.s32.totalorder %s106, %s107
    %p118 = scmp.eq.s32.totalorder %s14, 0
    %p119 = por %p117, %p118
    %p120 = scmp.ne.s32.totalorder %s106, %s107
    %p121 = scmp.eq.s32.totalorder %s15, 3
    %p122 = por %p120, %p121
    %p124 = scmp.ne.s32.totalorder %s107, %s123
    %p125 = scmp.eq.s32.totalorder %s15, 0
    %p126 = por %p124, %p125
    %p127 = scmp.le.s32.totalorder 1, %s9
    %p128 = scmp.lt.s32.totalorder %s9, 5
    %p129 = pnand %p127, %p128
    %p130 = pneg %p129
    // Predicated region
    $region9: #{spiking_conv2d_all.1} parent=5 // pred_check
      _
    $region10: #{spiking_conv2d_all.1} parent=5 // pred_check_branch
      %132 = sbr.rel (%p129) target = $region12
    $region11: #{spiking_conv2d_all.1} parent=5 // pred_region
      %s133 = ssub.s32 %s9, 1
      // Predicated region
      $region13: #{spiking_conv2d_all.1} parent=11 // pred_check
        %p134 = pneg %p70
      $region14: #{spiking_conv2d_all.1} parent=11 // pred_check_branch
        %136 = sbr.rel (%p134) target = $region16
      $region15: #{spiking_conv2d_all.1} parent=11 // pred_region
        _
      $region16: #{spiking_conv2d_all.1} parent=11 // pred_fallthru
        _
      // Predicated region
      $region17: #{spiking_conv2d_all.1} parent=11 // pred_check
        %p137 = pneg %p91
      $region18: #{spiking_conv2d_all.1} parent=11 // pred_check_branch
        %139 = sbr.rel (%p137) target = $region20
      $region19: #{spiking_conv2d_all.1} parent=11 // pred_region
        _
      $region20: #{spiking_conv2d_all.1} parent=11 // pred_fallthru
        _
    $region12: #{spiking_conv2d_all.1} parent=5 // pred_fallthru
      _
    %p140 = scmp.lt.s32.totalorder %s9, 4
    // Predicated region
    $region21: #{spiking_conv2d_all.1} parent=5 // pred_check
      %p141 = pneg %p140
    $region22: #{spiking_conv2d_all.1} parent=5 // pred_check_branch
      %143 = sbr.rel (%p141) target = $region24
    $region23: #{spiking_conv2d_all.1} parent=5 // pred_region
      // Predicated region
      $region25: #{spiking_conv2d_all.1} parent=23 // pred_check
        %p144 = pneg %p43
      $region26: #{spiking_conv2d_all.1} parent=23 // pred_check_branch
        %146 = sbr.rel (%p144) target = $region28
      $region27: #{spiking_conv2d_all.1} parent=23 // pred_region
        %p147 = scmp.lt.s32.totalorder %s16, 1
        %s148 = scalar_select %p147, %s16, 1
        %p149 = scmp.lt.s32.totalorder %s17, 1
        %s150 = scalar_select %p149, %s17, 1
        %s151 = smul.addr %s150, 3
        %s152 = smul.addr %s148, 6
        %s153 = sadd.s32 %s151, %s152
        %s154 = scalar_lea.vmem %s0, %s153
      $region28: #{spiking_conv2d_all.1} parent=23 // pred_fallthru
        _
    $region24: #{spiking_conv2d_all.1} parent=5 // pred_fallthru
      _
    %p155 = scmp.le.s32.totalorder 1, %s9
    %p156 = scmp.lt.s32.totalorder %s9, 5
    %p157 = pnand %p155, %p156
    %p158 = pneg %p157
    // Predicated region
    $region29: #{spiking_conv2d_all.1} parent=5 // pred_check
      _
    $region30: #{spiking_conv2d_all.1} parent=5 // pred_check_branch
      %160 = sbr.rel (%p157) target = $region32
    $region31: #{spiking_conv2d_all.1} parent=5 // pred_region
      %s161 = ssub.s32 %s9, 1
      %p162 = scmp.lt.s32.totalorder %s18, 1
      %s163 = scalar_select %p162, %s18, 1
      %p164 = scmp.lt.s32.totalorder %s19, 1
      %s165 = scalar_select %p164, %s19, 1
      %s166 = smul.addr %s165, 3
      %s167 = smul.addr %s163, 6
      %s168 = sadd.s32 %s166, %s167
      %s169 = scalar_lea.vmem %s0, %s168
      %p170 = pneg %p49
      %p171 = pneg %p46
      %p172 = pneg %p70
      %p173 = pneg %p67
      %p174 = pneg %p91
      %p175 = pneg %p88
      %p176 = pneg %p119
      %p177 = pneg %p116
      %s178 = smul.u32 2, %s19
      %p179 = scmp.lt.s32.totalorder %s18, 1
      %s180 = scalar_select %p179, %s18, 1
      %p181 = scmp.lt.s32.totalorder %s178, 3
      %s182 = scalar_select %p181, %s178, 3
      %s183 = smul.addr %s180, 4
      %s184 = sadd.s32 %s182, %s183
      %s185 = smul.addr %s184, 8
      %s186 = scalar_lea.vmem %s3, %s185
      %p187 = scmp.lt.s32.totalorder %s18, 1
      %s188 = scalar_select %p187, %s18, 1
      %p189 = scmp.lt.s32.totalorder %s19, 1
      %s190 = scalar_select %p189, %s19, 1
      %s191 = smul.addr %s190, 3
      %s192 = smul.addr %s188, 6
      %s193 = sadd.s32 %s191, %s192
      %s194 = scalar_lea.vmem %s0, %s193
      %s195 = smul.u32 2, %s19
      %p196 = scmp.lt.s32.totalorder %s18, 1
      %s197 = scalar_select %p196, %s18, 1
      %p198 = scmp.lt.s32.totalorder %s195, 3
      %s199 = scalar_select %p198, %s195, 3
      %s200 = smul.addr %s197, 4
      %s201 = sadd.s32 %s199, %s200
      %s202 = smul.addr %s201, 8
      %s203 = scalar_lea.vmem %s3, %s202
      %s204 = smul.u32 2, %s19
      %v206 = vld [vmem:[%s194] sm:$0x3]
      %208 = vst [vmem:[#allocation1] ss:$4 sm:$0xff] %v206
      %v209 = vld [vmem:[#allocation1] sm:$0xff]
      %211 = vst [vmem:[#allocation2] sm:$0x11] %v209
      %v212 = vld [vmem:[%s194] sm:$0x7]
      %s214 = scalar_lea.vmem [#allocation1], 1
      %215 = vst [vmem:[%s214] ss:$4 sm:$0xff] %v212
      %v216 = vld [vmem:[#allocation1] sm:$0xff]
      %v218 = vld [vmem:[#allocation1 + $0x8] sm:$0xff]
      %220 = vrot.lane.b32.xlu0 %v216, 127
      %v221 = vpop.permute.xlu0 %220
      %222 = vrot.lane.b32.xlu0 %v218, 127
      %v223 = vpop.permute.xlu0 %222
      %v224 = vrot.slane %v221, 4
      %v225 = vrot.slane %v223, 4
      %vm226 = vcmask 1043456
      %v227 = vsel %vm226, %v224, %v225
      %vm228 = vcmask 1039360
      %v229 = vsel %vm228, %v221, %v227
      %231 = vst [vmem:[#allocation2] sm:$0x22] %v229
      %v232 = vld [vmem:[%s194] sm:$0x7]
      %s234 = scalar_lea.vmem [#allocation1], 2
      %235 = vst [vmem:[%s234] ss:$4 sm:$0xff] %v232
      %v236 = vld [vmem:[#allocation1] sm:$0xff]
      %v238 = vld [vmem:[#allocation1 + $0x8] sm:$0xff]
      %240 = vrot.lane.b32.xlu0 %v236, 126
      %v241 = vpop.permute.xlu0 %240
      %242 = vrot.lane.b32.xlu0 %v238, 126
      %v243 = vpop.permute.xlu0 %242
      %v244 = vrot.slane %v241, 4
      %v245 = vrot.slane %v243, 4
      %v246 = vsel %vm226, %v244, %v245
      %vm247 = vcmask 1031168
      %v248 = vsel %vm247, %v241, %v246
      %250 = vst [vmem:[#allocation2] sm:$0x44] %v248
      %v251 = vld [vmem:[%s194] sm:$0x7]
      %s253 = scalar_lea.vmem [#allocation1], 3
      %254 = vst [vmem:[%s253] ss:$4 sm:$0xff] %v251
      %v255 = vld [vmem:[#allocation1] sm:$0xff]
      %v257 = vld [vmem:[#allocation1 + $0x8] sm:$0xff]
      %259 = vrot.lane.b32.xlu0 %v255, 110
      %v260 = vpop.permute.xlu0 %259
      %261 = vrot.lane.b32.xlu0 %v257, 110
      %v262 = vpop.permute.xlu0 %261
      %v263 = vrot.slane %v260, 4
      %v264 = vrot.slane %v262, 4
      %v265 = vsel %vm226, %v263, %v264
      %vm266 = vcmask 900096
      %v267 = vsel %vm266, %v260, %v265
      %269 = vst [vmem:[#allocation2] sm:$0x88] %v267
      %v270 = vld [vmem:[%s194] sm:$0x7]
      %272 = vst [vmem:[#allocation1] ss:$4 sm:$0xff] %v270
      %v273 = vld [vmem:[#allocation1] sm:$0xff]
      %v275 = vld [vmem:[#allocation1 + $0x8] sm:$0xff]
      %277 = vrot.lane.b32.xlu0 %v273, 109
      %v278 = vpop.permute.xlu0 %277
      %279 = vrot.lane.b32.xlu0 %v275, 109
      %v280 = vpop.permute.xlu0 %279
      %v281 = vrot.slane %v278, 4
      %v282 = vrot.slane %v280, 4
      %v283 = vsel %vm226, %v281, %v282
      %vm284 = vcmask 891904
      %v285 = vsel %vm284, %v278, %v283
      %287 = vst [vmem:[#allocation2 + $0x8] sm:$0x11] %v285
      %v288 = vld [vmem:[%s194] sm:$0x7]
      %s290 = scalar_lea.vmem [#allocation1], 1
      %291 = vst [vmem:[%s290] ss:$4 sm:$0xff] %v288
      %v292 = vld [vmem:[#allocation1] sm:$0xff]
      %v294 = vld [vmem:[#allocation1 + $0x8] sm:$0xff]
      %296 = vrot.lane.b32.xlu0 %v292, 108
      %v297 = vpop.permute.xlu0 %296
      %298 = vrot.lane.b32.xlu0 %v294, 108
      %v299 = vpop.permute.xlu0 %298
      %v300 = vrot.slane %v297, 4
      %v301 = vrot.slane %v299, 4
      %v302 = vsel %vm226, %v300, %v301
      %vm303 = vcmask 883712
      %v304 = vsel %vm303, %v297, %v302
      %306 = vst [vmem:[#allocation2 + $0x8] sm:$0x22] %v304
      %v307 = vld [vmem:[%s194] sm:$0x7]
      %s309 = scalar_lea.vmem [#allocation1], 2
      %310 = vst [vmem:[%s309] ss:$4 sm:$0xff] %v307
      %v311 = vld [vmem:[#allocation1] sm:$0xff]
      %v313 = vld [vmem:[#allocation1 + $0x8] sm:$0xff]
      %315 = vrot.lane.b32.xlu0 %v311, 92
      %v316 = vpop.permute.xlu0 %315
      %317 = vrot.lane.b32.xlu0 %v313, 92
      %v318 = vpop.permute.xlu0 %317
      %v319 = vrot.slane %v316, 4
      %v320 = vrot.slane %v318, 4
      %v321 = vsel %vm226, %v319, %v320
      %vm322 = vcmask 752640
      %v323 = vsel %vm322, %v316, %v321
      %325 = vst [vmem:[#allocation2 + $0x8] sm:$0x44] %v323
      %v326 = vld [vmem:[%s194] sm:$0x7]
      %s328 = scalar_lea.vmem [#allocation1], 3
      %329 = vst [vmem:[%s328] ss:$4 sm:$0xff] %v326
      %v330 = vld [vmem:[#allocation1] sm:$0xff]
      %v332 = vld [vmem:[#allocation1 + $0x8] sm:$0xff]
      %334 = vrot.lane.b32.xlu0 %v330, 91
      %v335 = vpop.permute.xlu0 %334
      %336 = vrot.lane.b32.xlu0 %v332, 91
      %v337 = vpop.permute.xlu0 %336
      %v338 = vrot.slane %v335, 4
      %v339 = vrot.slane %v337, 4
      %v340 = vsel %vm226, %v338, %v339
      %vm341 = vcmask 744448
      %v342 = vsel %vm341, %v335, %v340
      %344 = vst [vmem:[#allocation2 + $0x8] sm:$0x88] %v342
      %v345 = vld [vmem:[%s194] sm:$0x7]
      %347 = vst [vmem:[#allocation1] ss:$4 sm:$0xff] %v345
      %v348 = vld [vmem:[#allocation1] sm:$0xff]
      %v350 = vld [vmem:[#allocation1 + $0x8] sm:$0xff]
      %352 = vrot.lane.b32.xlu0 %v348, 90
      %v353 = vpop.permute.xlu0 %352
      %354 = vrot.lane.b32.xlu0 %v350, 90
      %v355 = vpop.permute.xlu0 %354
      %v356 = vrot.slane %v353, 4
      %v357 = vrot.slane %v355, 4
      %v358 = vsel %vm226, %v356, %v357
      %vm359 = vcmask 736256
      %v360 = vsel %vm359, %v353, %v358
      %362 = vst [vmem:[#allocation2 + $0x10] sm:$0x11] %v360
      %v363 = vld [vmem:[%s1] sm:$0xf]
      %v364 = vld [vmem:[#allocation2] sm:$0xff]
      %v365 = vld [vmem:[#allocation2 + $0x8] sm:$0xff]
      %v366 = vld [vmem:[#allocation2 + $0x10] sm:$0x11]
      %v367 = vld [vmem:[%s2] sm:$0xff]
      %369 = vset.pattern.permute.xlu0 0
      %370 = vperm.xlu0 %369, %v367
      %v371 = vpop.permute.xlu0 %370
      %v376 = vunpack.c.l.b16 %v364
      %v377 = vunpack.c.h.b16 %v364
      %v378 = vunpack.c.l.b16 %v365
      %v379 = vunpack.c.h.b16 %v365
      %v380 = vunpack.c.l.b16 %v366
      %v381 = vunpack.c.h.b16 %v366
      %v382 = vpack.c.b16 %v378, %v376
      %v383 = vpack.c.b16 %v379, %v377
      %v384 = vpack.c.b16 %v380, %v380
      %v385 = vpack.c.b16 %v381, %v381
      %vm388 = vcmask 146432
      %v390 = vsel %vm388, %v363, 0
      %vm392 = vcmask 1040384
      %v394 = vsel %vm392, %v384, 0
      %v397 = vsel %vm392, %v385, 0
      %399 = vmatpush.bf16.msra.mxu0 0
      %400 = vmatpush.bf16.msra.mxu0 0
      %401 = vmatpush.bf16.msra.mxu0 0
      %402 = vmatpush.bf16.msra.mxu0 0
      %403 = vmatpush.bf16.msra.mxu0 0
      %404 = vmatpush.bf16.msra.mxu0 0
      %405 = vmatpush.bf16.msra.mxu0 %v394
      %406 = vmatpush.bf16.msra.mxu0 %v382
      %407 = vmatmul.bf16.gmra.mxu0 %v390
      %v408 = vpop.f32.mrf.mxu0
      %v409 = vadd.f32 %v371, %v408
      %v410 = vpop.f32.mrf.mxu0
      %411 = vdwg.mxu0
      %412 = vmatpush.bf16.msra.mxu0 0
      %413 = vmatpush.bf16.msra.mxu0 0
      %414 = vmatpush.bf16.msra.mxu0 0
      %415 = vmatpush.bf16.msra.mxu0 0
      %416 = vmatpush.bf16.msra.mxu0 0
      %417 = vmatpush.bf16.msra.mxu0 0
      %418 = vmatpush.bf16.msra.mxu0 %v397
      %419 = vmatpush.bf16.msra.mxu0 %v383
      %420 = vmatmul.bf16.gmra.mxu0 %v390
      %v421 = vpop.f32.mrf.mxu0
      %v422 = vadd.f32 %v371, %v421
      %v423 = vpop.f32.mrf.mxu0
      %424 = vdwg.mxu0
      %v425 = vmax.f32 %v409, 1.0
      %v426 = vmax.f32 %v422, 1.0
      %v427 = vmin.f32 %v425, 2.0
      %v428 = vmin.f32 %v426, 2.0
      %429 = vst [vmem:[%s203] sm:$0xff] %v427
      %430 = vst [vmem:[%s203 + $0x8] sm:$0xff] %v428
      %s431 = smul.u32 2, %s19
      %p432 = scmp.lt.s32.totalorder %s18, 1
      %s433 = scalar_select %p432, %s18, 1
      %p434 = scmp.lt.s32.totalorder %s431, 3
      %s435 = scalar_select %p434, %s431, 3
      %s436 = smul.addr %s433, 4
      %s437 = sadd.s32 %s435, %s436
      %s438 = smul.addr %s437, 8
      %s439 = scalar_lea.vmem %s3, %s438
      // Predicated region
      $region33: #{spiking_conv2d_all.1} parent=31 // pred_check
        %p440 = pneg %p116
      $region34: #{spiking_conv2d_all.1} parent=31 // pred_check_branch
        %442 = sbr.rel (%p440) target = $region36
      $region35: #{spiking_conv2d_all.1} parent=31 // pred_region
        %s443 = smul.u32 2, %s19
      $region36: #{spiking_conv2d_all.1} parent=31 // pred_fallthru
        _
    $region32: #{spiking_conv2d_all.1} parent=5 // pred_fallthru
      _
    %p444 = scmp.le.s32.totalorder 2, %s9
    // Predicated region
    $region37: #{spiking_conv2d_all.1} parent=5 // pred_check
      %p445 = pneg %p444
    $region38: #{spiking_conv2d_all.1} parent=5 // pred_check_branch
      %447 = sbr.rel (%p445) target = $region40
    $region39: #{spiking_conv2d_all.1} parent=5 // pred_region
      %s448 = ssub.s32 %s9, 2
      // Predicated region
      $region41: #{spiking_conv2d_all.1} parent=39 // pred_check
        %p449 = pneg %p122
      $region42: #{spiking_conv2d_all.1} parent=39 // pred_check_branch
        %451 = sbr.rel (%p449) target = $region44
      $region43: #{spiking_conv2d_all.1} parent=39 // pred_region
        %s452 = smul.u32 2, %s21
        %p453 = scmp.lt.s32.totalorder %s20, 1
        %s454 = scalar_select %p453, %s20, 1
        %p455 = scmp.lt.s32.totalorder %s452, 3
        %s456 = scalar_select %p455, %s452, 3
        %s457 = smul.addr %s454, 4
        %s458 = sadd.s32 %s456, %s457
        %s459 = smul.addr %s458, 8
        %s460 = scalar_lea.vmem %s3, %s459
      $region44: #{spiking_conv2d_all.1} parent=39 // pred_fallthru
        _
    $region40: #{spiking_conv2d_all.1} parent=5 // pred_fallthru
      _
  $region6: #{spiking_conv2d_all.1} parent=0 // loop_footer
    %s13 = sadd.s32 1, %s9
  $region7: #{spiking_conv2d_all.1} parent=0 // loop_footer_branch
    %8 = sbr.rel target = $region3
  $region8: #{spiking_conv2d_all.1} parent=0 // loop_exit
    _

</llo_original>
